<compile_context>
chip_gen: v7x
topology: tpu7x:2x2x1
jax: 0.10.0
libtpu: 0.0.40
codegen_flags: <defaults>
</compile_context>

<pallas_src>
import jax
import jax.numpy as jnp
from jax import lax
from jax.experimental import pallas as pl
from jax.experimental.pallas import tpu as pltpu

LANE = 128


def _round_up(x, m):
    return ((x + m - 1) // m) * m


def _cdiv(a, b):
    return -(-a // b)


# ----------------------------------- kernel ---------------------------------------

def _make_kernel(num_layers, out_features, in_bits, hid_bits, out_bits,
                 max_val, epi_scale, post_bias):
    """refs = (x, w_0..w_{L-1} (bf16, [K, 128], BN+scale-folded), b_pack [L, 128] f32, out)."""
    n_in = 2.0 ** in_bits - 1.0
    inv_s_in = n_in / max_val              # input QuantReLU: 1/scale (CONST scaling)
    n_hid = 2.0 ** hid_bits - 1.0
    half_out = 2.0 ** (out_bits - 1)

    def kernel(*refs):
        x_ref = refs[0]
        w_refs = refs[1:1 + num_layers]
        b_ref = refs[1 + num_layers]
        o_ref = refs[2 + num_layers]

        # layer-0 input quantization (QuantReLU, CONST scale) -> integer codes.
        # The dequant scale is folded into layer-0's fused weights in the wrapper.
        x = x_ref[...].astype(jnp.float32)
        c = jnp.clip(jnp.round(jnp.maximum(x, 0.0) * inv_s_in), 0.0, n_in)

        b_all = b_ref[...]                  # [num_layers, LANE] fused biases (code units)

        for i in range(num_layers):
            # sparse (pre-masked, BN+scale-folded) linear on the MXU:
            # bf16 operands (activation codes are exact small ints), f32 accumulate.
            h = jnp.dot(c.astype(jnp.bfloat16), w_refs[i][...],
                        preferred_element_type=jnp.float32)
            h = h + b_all[i:i + 1, :h.shape[1]]          # full-lane bias row
            if i < num_layers - 1:
                # hidden QuantReLU in code units (1/scale folded into w/b): round + clip
                c = jnp.clip(jnp.round(h), 0.0, n_hid)
            else:
                # output QuantHardTanh in code units, then ScalarBiasScale epilogue.
                # TODO(synk): verify brevitas non-narrow signed scale convention
                #             (max_val/2^(b-1) vs max_val/(2^(b-1)-1)) against a real checkpoint.
                q = jnp.clip(jnp.round(h), -half_out, half_out - 1.0)
                if epi_scale != 1.0:                     # compile-time constant fold
                    q = q * epi_scale
                out = q + post_bias

        # store only the real output columns (8x fewer HBM write bytes than 128-lane f32)
        o_ref[...] = out[:, :out_features].astype(o_ref.dtype)

    return kernel


# --------------------------------- python wrapper ----------------------------------

def minst_model_neq_forward(x, layer_params, *, in_bits, hid_bits, out_bits,
                            max_val=2.0, post_scale=1.0, post_bias=0.33,
                            bn_eps=1e-5, max_batch_tile=2048):
    """layer_params: list of dicts with keys
         w (in,out; already masked+transposed), b, gamma, beta, mean, var  (all 1-D [out])."""
    num_layers = len(layer_params)
    batch, in_features = x.shape
    out_features = layer_params[-1]["w"].shape[1]

    # Quantizer scales (brevitas INT, max_val=2):
    s_in = max_val / (2.0 ** in_bits - 1.0)          # input QuantReLU (CONST)
    s_hid = max_val / (2.0 ** hid_bits - 1.0)        # hidden QuantReLU
    s_out = max_val / (2.0 ** (out_bits - 1))        # output QuantHardTanh (see TODO above)
    epi_scale = s_out * post_scale                   # folded dequant * ScalarBiasScale scale

    # ---- fold eval-mode BatchNorm, linear bias and quant scales into (w_fused, b_fused) ----
    ws, bs, prev_width = [], [], in_features
    for li, p in enumerate(layer_params):
        bn_s = p["gamma"] * lax.rsqrt(p["var"] + bn_eps)                 # [out]
        s_prev = s_in if li == 0 else s_hid
        s_cur = s_hid if li < num_layers - 1 else s_out
        w_f = p["w"] * (bn_s / s_cur)[None, :] * s_prev                  # [in, out] f32
        b_f = ((p["b"] - p["mean"]) * bn_s + p["beta"]) / s_cur          # [out]
        k_in, o = w_f.shape
        o_pad = _round_up(o, LANE)
        # pad output lanes to 128 (zeros stay zero through the code-space quantizers) and
        # pad K rows up to the previous layer's padded width (those activation lanes are 0).
        w_f = jnp.pad(w_f, ((0, prev_width - k_in), (0, o_pad - o))).astype(jnp.bfloat16)
        b_f = jnp.pad(b_f, ((0, o_pad - o),)).astype(jnp.float32)
        ws.append(w_f)
        bs.append(b_f)
        prev_width = o_pad
    b_pack = jnp.stack(bs)                                               # [num_layers, LANE] f32

    # ---- 1-D grid over batch (pipelined; ">=2 steps" so v7x can use both TensorCores) ----
    num_steps = max(1, _cdiv(batch, max_batch_tile))
    if batch >= 16:
        num_steps = max(num_steps, 2)
    tb = _round_up(_cdiv(batch, num_steps), 8)
    padded_batch = _round_up(batch, tb)
    if padded_batch != batch:
        x = jnp.pad(x, ((0, padded_batch - batch), (0, 0)))

    kernel = _make_kernel(num_layers, out_features, in_bits, hid_bits, out_bits,
                          max_val, epi_scale, post_bias)

    in_specs = [pl.BlockSpec((tb, in_features), lambda i: (i, 0))]       # activations: tiled
    for w in ws:                                                         # params: VMEM-resident
        in_specs.append(pl.BlockSpec(w.shape, lambda i: (0, 0)))
    in_specs.append(pl.BlockSpec(b_pack.shape, lambda i: (0, 0)))

    out = pl.pallas_call(
        kernel,
        out_shape=jax.ShapeDtypeStruct((padded_batch, out_features), jnp.float32),
        grid_spec=pltpu.PrefetchScalarGridSpec(
            num_scalar_prefetch=0,
            grid=(padded_batch // tb,),
            in_specs=in_specs,
            out_specs=pl.BlockSpec((tb, out_features), lambda i: (i, 0)),
        ),
        compiler_params=pltpu.CompilerParams(
            dimension_semantics=("parallel",),
            vmem_limit_bytes=32 * 1024 * 1024,   # safe on v5e/v6e/v7x; headroom for tb=2048-4096
        ),
    )(x, *ws, b_pack)

    return out[:batch]


# ------------------------------ deterministic params -------------------------------

def _random_fixed_sparsity_mask(key, in_features, out_features, fan_in):
    # RandomFixedSparsityMask2D: exactly `fan_in` nonzeros per output neuron (vectorized).
    scores = jax.random.uniform(key, (out_features, in_features))
    rank = jnp.argsort(jnp.argsort(scores, axis=1), axis=1)
    return (rank < fan_in).astype(jnp.float32)                        # (out, in)


def build_params(key, num_neurons, fanins):
    params = []
    for i in range(1, len(num_neurons)):
        in_f, out_f = num_neurons[i - 1], num_neurons[i]
        key, kw, kb, km, kg, kbe = jax.random.split(key, 6)
        w = jax.random.normal(kw, (out_f, in_f), jnp.float32) * (1.0 / jnp.sqrt(in_f))
        b = 0.05 * jax.random.normal(kb, (out_f,), jnp.float32)
        mask = _random_fixed_sparsity_mask(km, in_f, out_f, fanins[i - 1])
        gamma = 1.0 + 0.1 * jax.random.normal(kg, (out_f,), jnp.float32)
        beta = 0.1 * jax.random.normal(kbe, (out_f,), jnp.float32)
        mean = jnp.zeros((out_f,), jnp.float32)   # eval-mode running stats
        var = jnp.ones((out_f,), jnp.float32)
        params.append(dict(
            w=(w * mask).T,         # -> [in, out], pre-masked
            b=b, gamma=gamma, beta=beta, mean=mean, var=var,
        ))
    return params


# ----------------------------------- driver ----------------------------------------

if __name__ == "__main__":
    model_config = {
        "input_length": 32,
        "hidden_layers": [32, 32],
        "output_length": 16,
        "input_bitwidth": 2,
        "hidden_bitwidth": 2,
        "output_bitwidth": 2,
        "input_fanin": 4,
        "hidden_fanin": 4,
        "output_fanin": 4,
    }
    num_neurons = ([model_config["input_length"]]
                   + model_config["hidden_layers"]
                   + [model_config["output_length"]])
    fanins = ([model_config["input_fanin"]]
              + [model_config["hidden_fanin"]] * (len(model_config["hidden_layers"]) - 1)
              + [model_config["output_fanin"]])

    key = jax.random.PRNGKey(0)
    kx, kp = jax.random.split(key)
    batch = 8
    x = jax.random.normal(kx, (batch, model_config["input_length"]), jnp.float32)

    layer_params = build_params(kp, num_neurons, fanins)

    # TODO(synk): brevitas learned (PARAMETER) activation scales and ScalarBiasScale's learned
    # scale are frozen at their init values (max_val=2, scale=1, bias=0.33); BN uses eval-mode
    # running stats -- a checkpoint load would supply the trained values.
    out = minst_model_neq_forward(
        x, layer_params,
        in_bits=model_config["input_bitwidth"],
        hid_bits=model_config["hidden_bitwidth"],
        out_bits=model_config["output_bitwidth"],
        max_val=2.0, post_scale=1.0, post_bias=0.33,
    )
    jax.block_until_ready(out)
    assert out.shape == (batch, model_config["output_length"])
    print("KERNEL_OK")
</pallas_src>

<mosaic_0001>
module attributes {stable_mosaic.version = 11 : i64} {
  func.func @kernel(%arg0: i32, %arg1: memref<8x32xf32, #tpu.memory_space<vmem>>, %arg2: memref<32x128xbf16, #tpu.memory_space<vmem>>, %arg3: memref<128x128xbf16, #tpu.memory_space<vmem>>, %arg4: memref<128x128xbf16, #tpu.memory_space<vmem>>, %arg5: memref<3x128xf32, #tpu.memory_space<vmem>>, %arg6: memref<8x16xf32, #tpu.memory_space<vmem>>) attributes {dimension_semantics = [#tpu.dimension_semantics<parallel>], iteration_bounds = array<i64: 1>, scalar_prefetch = 0 : i64, scratch_operands = 0 : i64, tpu.core_type = #tpu.core_type<tc>, window_params = [{transform_indices = @transform_0, window_bounds = array<i64: 8, 32>}, {pipeline_mode = #tpu.pipeline_mode<synchronous>, transform_indices = @transform_1, window_bounds = array<i64: 32, 128>}, {pipeline_mode = #tpu.pipeline_mode<synchronous>, transform_indices = @transform_2, window_bounds = array<i64: 128, 128>}, {pipeline_mode = #tpu.pipeline_mode<synchronous>, transform_indices = @transform_3, window_bounds = array<i64: 128, 128>}, {pipeline_mode = #tpu.pipeline_mode<synchronous>, transform_indices = @transform_4, window_bounds = array<i64: 3, 128>}, {transform_indices = @transform_5, window_bounds = array<i64: 8, 16>}]} {
    %c0 = arith.constant 0 : index
    %c0_0 = arith.constant 0 : index
    %0 = vector.load %arg1[%c0, %c0_0] : memref<8x32xf32, #tpu.memory_space<vmem>>, vector<8x32xf32>
    %cst = arith.constant 0.000000e+00 : f32
    %1 = vector.broadcast %cst : f32 to vector<8x32xf32>
    %2 = arith.maximumf %0, %1 : vector<8x32xf32>
    %cst_1 = arith.constant 1.500000e+00 : f32
    %3 = vector.broadcast %cst_1 : f32 to vector<8x32xf32>
    %4 = arith.mulf %2, %3 : vector<8x32xf32>
    %5 = math.roundeven %4 : vector<8x32xf32>
    %cst_2 = arith.constant 0.000000e+00 : f32
    %cst_3 = arith.constant 3.000000e+00 : f32
    %6 = vector.broadcast %cst_2 : f32 to vector<8x32xf32>
    %7 = arith.maximumf %6, %5 : vector<8x32xf32>
    %8 = vector.broadcast %cst_3 : f32 to vector<8x32xf32>
    %9 = arith.minimumf %8, %7 : vector<8x32xf32>
    %c0_4 = arith.constant 0 : index
    %c0_5 = arith.constant 0 : index
    %10 = vector.load %arg5[%c0_4, %c0_5] : memref<3x128xf32, #tpu.memory_space<vmem>>, vector<3x128xf32>
    %11 = arith.truncf %9 : vector<8x32xf32> to vector<8x32xbf16>
    %c0_6 = arith.constant 0 : index
    %c0_7 = arith.constant 0 : index
    %12 = vector.load %arg2[%c0_6, %c0_7] : memref<32x128xbf16, #tpu.memory_space<vmem>>, vector<32x128xbf16>
    %cst_8 = arith.constant dense<0.000000e+00> : vector<8x128xf32>
    %13 = tpu.matmul %11, %12, %cst_8 {dimension_numbers = #tpu.dot_dimension_numbers<[1], [0], [0], [1], [0, 0, 1, 1], [], []>} : vector<8x32xbf16>, vector<32x128xbf16>, vector<8x128xf32> -> vector<8x128xf32>
    %14 = vector.extract_strided_slice %10 {offsets = [0, 0], sizes = [1, 128], strides = [1, 1]} : vector<3x128xf32> to vector<1x128xf32>
    %15 = vector.broadcast %14 : vector<1x128xf32> to vector<8x128xf32>
    %16 = arith.addf %13, %15 : vector<8x128xf32>
    %17 = math.roundeven %16 : vector<8x128xf32>
    %cst_9 = arith.constant 0.000000e+00 : f32
    %cst_10 = arith.constant 3.000000e+00 : f32
    %18 = vector.broadcast %cst_9 : f32 to vector<8x128xf32>
    %19 = arith.maximumf %18, %17 : vector<8x128xf32>
    %20 = vector.broadcast %cst_10 : f32 to vector<8x128xf32>
    %21 = arith.minimumf %20, %19 : vector<8x128xf32>
    %22 = arith.truncf %21 : vector<8x128xf32> to vector<8x128xbf16>
    %c0_11 = arith.constant 0 : index
    %c0_12 = arith.constant 0 : index
    %23 = vector.load %arg3[%c0_11, %c0_12] : memref<128x128xbf16, #tpu.memory_space<vmem>>, vector<128x128xbf16>
    %cst_13 = arith.constant dense<0.000000e+00> : vector<8x128xf32>
    %24 = tpu.matmul %22, %23, %cst_13 {dimension_numbers = #tpu.dot_dimension_numbers<[1], [0], [0], [1], [0, 0, 1, 1], [], []>} : vector<8x128xbf16>, vector<128x128xbf16>, vector<8x128xf32> -> vector<8x128xf32>
    %25 = vector.extract_strided_slice %10 {offsets = [1, 0], sizes = [1, 128], strides = [1, 1]} : vector<3x128xf32> to vector<1x128xf32>
    %26 = vector.broadcast %25 : vector<1x128xf32> to vector<8x128xf32>
    %27 = arith.addf %24, %26 : vector<8x128xf32>
    %28 = math.roundeven %27 : vector<8x128xf32>
    %cst_14 = arith.constant 0.000000e+00 : f32
    %cst_15 = arith.constant 3.000000e+00 : f32
    %29 = vector.broadcast %cst_14 : f32 to vector<8x128xf32>
    %30 = arith.maximumf %29, %28 : vector<8x128xf32>
    %31 = vector.broadcast %cst_15 : f32 to vector<8x128xf32>
    %32 = arith.minimumf %31, %30 : vector<8x128xf32>
    %33 = arith.truncf %32 : vector<8x128xf32> to vector<8x128xbf16>
    %c0_16 = arith.constant 0 : index
    %c0_17 = arith.constant 0 : index
    %34 = vector.load %arg4[%c0_16, %c0_17] : memref<128x128xbf16, #tpu.memory_space<vmem>>, vector<128x128xbf16>
    %cst_18 = arith.constant dense<0.000000e+00> : vector<8x128xf32>
    %35 = tpu.matmul %33, %34, %cst_18 {dimension_numbers = #tpu.dot_dimension_numbers<[1], [0], [0], [1], [0, 0, 1, 1], [], []>} : vector<8x128xbf16>, vector<128x128xbf16>, vector<8x128xf32> -> vector<8x128xf32>
    %36 = vector.extract_strided_slice %10 {offsets = [2, 0], sizes = [1, 128], strides = [1, 1]} : vector<3x128xf32> to vector<1x128xf32>
    %37 = vector.broadcast %36 : vector<1x128xf32> to vector<8x128xf32>
    %38 = arith.addf %35, %37 : vector<8x128xf32>
    %39 = math.roundeven %38 : vector<8x128xf32>
    %cst_19 = arith.constant -2.000000e+00 : f32
    %cst_20 = arith.constant 1.000000e+00 : f32
    %40 = vector.broadcast %cst_19 : f32 to vector<8x128xf32>
    %41 = arith.maximumf %40, %39 : vector<8x128xf32>
    %42 = vector.broadcast %cst_20 : f32 to vector<8x128xf32>
    %43 = arith.minimumf %42, %41 : vector<8x128xf32>
    %cst_21 = arith.constant 3.300000e-01 : f32
    %44 = vector.broadcast %cst_21 : f32 to vector<8x128xf32>
    %45 = arith.addf %43, %44 : vector<8x128xf32>
    %46 = vector.extract_strided_slice %45 {offsets = [0, 0], sizes = [8, 16], strides = [1, 1]} : vector<8x128xf32> to vector<8x16xf32>
    %c0_22 = arith.constant 0 : index
    %c0_23 = arith.constant 0 : index
    %47 = vector.load %arg6[%c0_22, %c0_23] : memref<8x16xf32, #tpu.memory_space<vmem>>, vector<8x16xf32>
    tpu.vector_store %arg6[%c0_22, %c0_23], %46 {strides = array<i32>} : memref<8x16xf32, #tpu.memory_space<vmem>>, vector<8x16xf32>,
    return
  }
  func.func @transform_0(%arg0: i32) -> (i32, i32) {
    %c0_i32 = arith.constant 0 : i32
    %c0_i32_0 = arith.constant 0 : i32
    return %arg0, %c0_i32 : i32, i32
  }
  func.func @transform_1(%arg0: i32) -> (i32, i32) {
    %c0_i32 = arith.constant 0 : i32
    %c0_i32_0 = arith.constant 0 : i32
    %c0_i32_1 = arith.constant 0 : i32
    return %c0_i32, %c0_i32_0 : i32, i32
  }
  func.func @transform_2(%arg0: i32) -> (i32, i32) {
    %c0_i32 = arith.constant 0 : i32
    %c0_i32_0 = arith.constant 0 : i32
    %c0_i32_1 = arith.constant 0 : i32
    return %c0_i32, %c0_i32_0 : i32, i32
  }
  func.func @transform_3(%arg0: i32) -> (i32, i32) {
    %c0_i32 = arith.constant 0 : i32
    %c0_i32_0 = arith.constant 0 : i32
    %c0_i32_1 = arith.constant 0 : i32
    return %c0_i32, %c0_i32_0 : i32, i32
  }
  func.func @transform_4(%arg0: i32) -> (i32, i32) {
    %c0_i32 = arith.constant 0 : i32
    %c0_i32_0 = arith.constant 0 : i32
    %c0_i32_1 = arith.constant 0 : i32
    return %c0_i32, %c0_i32_0 : i32, i32
  }
  func.func @transform_5(%arg0: i32) -> (i32, i32) {
    %c0_i32 = arith.constant 0 : i32
    %c0_i32_0 = arith.constant 0 : i32
    return %arg0, %c0_i32 : i32, i32
  }
}

</mosaic_0001>

<llo_original>
// kernel: tpu_custom_call.1
$region0: #{tpu_custom_call.1}
  #allocation0 [shape = 'u32[]', space=smem, size = 0x4, offset = 0x4, fixed_abs, tag = 'smem constant byte address 0x4 - core index']
  #allocation1 [shape = 'u32[144,128]{1,0:T(1,128)}', space=vmem, size = 0x12000, scoped, tag = 'internal scratch']
  %s0 = inlined_call_operand.hbm [shape: f32[8,32], index: 0, kind: input, shape index: {}]
  %s1 = inlined_call_operand.hbm [shape: bf16[32,128], index: 1, kind: input, shape index: {}]
  %s2 = inlined_call_operand.hbm [shape: bf16[128,128], index: 2, kind: input, shape index: {}]
  %s3 = inlined_call_operand.hbm [shape: bf16[128,128], index: 3, kind: input, shape index: {}]
  %s4 = inlined_call_operand.vmem [shape: f32[3,128], index: 4, kind: input, shape index: {}]
  %s5 = inlined_call_operand.hbm [shape: f32[8,16], index: 5, kind: output, shape index: {}]
  %s6 = sld [smem:[#allocation0]]
  $region46: #{tpu_custom_call.1} parent=0
    _
  %s8 = ssub.s32 1, %s6
  %s9 = scalar_select 0, %s8, %s6
  $region1: #{tpu_custom_call.1} parent=0
    #allocation2 [shape = 'u8[4096]{0}', space=vmem, size = 0x1000, scoped, tag = 'input window, operand 0, single buffered']
    #allocation3 [shape = 's32[1]{0}', space=sflag, size = 0x4, scoped, tag = 'scoped memory for tpu_custom_call.1']
    #allocation4 [shape = 's32[1]{0}', space=sflag, size = 0x4, scoped, tag = 'scoped memory for tpu_custom_call.1']
    #allocation5 [shape = 'u8[8192]{0}', space=vmem, size = 0x2000, scoped, tag = 'input window, operand 1, single buffered']
    #allocation6 [shape = 's32[1]{0}', space=sflag, size = 0x4, scoped, tag = 'scoped memory for tpu_custom_call.1']
    #allocation7 [shape = 'u8[32768]{0}', space=vmem, size = 0x8000, scoped, tag = 'input window, operand 2, single buffered']
    #allocation8 [shape = 'u8[32768]{0}', space=vmem, size = 0x8000, scoped, tag = 'input window, operand 3, single buffered']
    #allocation9 [shape = 's32[1]{0}', space=sflag, size = 0x4, scoped, tag = 'scoped memory for tpu_custom_call.1']
    #allocation10 [shape = 'u8[4096]{0}', space=vmem, size = 0x1000, scoped, tag = 'output window, operand 0, single buffered']
    %10 = vsyncpa [#allocation3], 0
    %11 = vsyncpa [#allocation6], 0
    %12 = vsyncpa [#allocation9], 0
    %13 = vsyncpa [#allocation4], 0
    // Predicated region
    $region2: #{tpu_custom_call.1} parent=1 // pred_check
      _
    $region3: #{tpu_custom_call.1} parent=1 // pred_check_branch
      %15 = sbr.rel (0) target = $region5
    $region4: #{tpu_custom_call.1} parent=1 // pred_region
      %s17 = ssub.s32 128, 128
      %18 = vsyncadd [#allocation3], %s17
      %s20 = sshll.u32 [#allocation2], 4
      %s21 = int_to_ptr.vmem [resolvable:$true] %s20
      %23 = dma.hbm_to_vmem [thread:$0]  %s0, 128, %s21, [#allocation3]
    $region5: #{tpu_custom_call.1} parent=1 // pred_fallthru
      _
    // Predicated region
    $region6: #{tpu_custom_call.1} parent=1 // pred_check
      _
    $region7: #{tpu_custom_call.1} parent=1 // pred_check_branch
      %25 = sbr.rel (0) target = $region9
    $region8: #{tpu_custom_call.1} parent=1 // pred_region
      %s27 = ssub.s32 256, 256
      %28 = vsyncadd [#allocation6], %s27
      %s29 = sshll.u32 [#allocation5], 4
      %s30 = int_to_ptr.vmem [resolvable:$true] %s29
      %35 = dma.hbm_to_vmem [thread:$0]  %s1, 256, %s30, [#allocation6], 64, 64, 4
    $region9: #{tpu_custom_call.1} parent=1 // pred_fallthru
      _
    // Predicated region
    $region10: #{tpu_custom_call.1} parent=1 // pred_check
      _
    $region11: #{tpu_custom_call.1} parent=1 // pred_check_branch
      %37 = sbr.rel (0) target = $region13
    $region12: #{tpu_custom_call.1} parent=1 // pred_region
      %s39 = ssub.s32 1024, 1024
      %40 = vsyncadd [#allocation6], %s39
      %s41 = sshll.u32 [#allocation7], 4
      %s42 = int_to_ptr.vmem [resolvable:$true] %s41
      %47 = dma.hbm_to_vmem [thread:$0]  %s2, 1024, %s42, [#allocation6], 64, 64, 4
    $region13: #{tpu_custom_call.1} parent=1 // pred_fallthru
      _
    // Predicated region
    $region14: #{tpu_custom_call.1} parent=1 // pred_check
      _
    $region15: #{tpu_custom_call.1} parent=1 // pred_check_branch
      %49 = sbr.rel (0) target = $region17
    $region16: #{tpu_custom_call.1} parent=1 // pred_region
      %s51 = ssub.s32 1024, 1024
      %52 = vsyncadd [#allocation9], %s51
      %s53 = sshll.u32 [#allocation8], 4
      %s54 = int_to_ptr.vmem [resolvable:$true] %s53
      %59 = dma.hbm_to_vmem [thread:$0]  %s3, 1024, %s54, [#allocation9], 64, 64, 4
    $region17: #{tpu_custom_call.1} parent=1 // pred_fallthru
      _
    // Predicated region
    $region18: #{tpu_custom_call.1} parent=1 // pred_check
      _
    $region19: #{tpu_custom_call.1} parent=1 // pred_check_branch
      %61 = sbr.rel (0) target = $region21
    $region20: #{tpu_custom_call.1} parent=1 // pred_region
      _
    $region21: #{tpu_custom_call.1} parent=1 // pred_fallthru
      _
    // Predicated region
    $region22: #{tpu_custom_call.1} parent=1 // pred_check
      _
    $region23: #{tpu_custom_call.1} parent=1 // pred_check_branch
      %63 = sbr.rel (0) target = $region25
    $region24: #{tpu_custom_call.1} parent=1 // pred_region
      %64 = dma.done [#allocation3], 128
    $region25: #{tpu_custom_call.1} parent=1 // pred_fallthru
      _
    // Predicated region
    $region26: #{tpu_custom_call.1} parent=1 // pred_check
      _
    $region27: #{tpu_custom_call.1} parent=1 // pred_check_branch
      %66 = sbr.rel (0) target = $region29
    $region28: #{tpu_custom_call.1} parent=1 // pred_region
      %67 = dma.done [#allocation6], 256
    $region29: #{tpu_custom_call.1} parent=1 // pred_fallthru
      _
    // Predicated region
    $region30: #{tpu_custom_call.1} parent=1 // pred_check
      _
    $region31: #{tpu_custom_call.1} parent=1 // pred_check_branch
      %69 = sbr.rel (0) target = $region33
    $region32: #{tpu_custom_call.1} parent=1 // pred_region
      %70 = dma.done [#allocation6], 1024
    $region33: #{tpu_custom_call.1} parent=1 // pred_fallthru
      _
    // Predicated region
    $region34: #{tpu_custom_call.1} parent=1 // pred_check
      _
    $region35: #{tpu_custom_call.1} parent=1 // pred_check_branch
      %72 = sbr.rel (0) target = $region37
    $region36: #{tpu_custom_call.1} parent=1 // pred_region
      %73 = dma.done [#allocation9], 1024
    $region37: #{tpu_custom_call.1} parent=1 // pred_fallthru
      _
    %v75 = vld [vmem:[#allocation2] sm:$0xff]
    %v76 = vmax.f32 %v75, 0.0
    %v77 = vmul.f32 %v76, 1.5
    %v78 = vround.ne.pseudo %v77
    %v79 = vmax.f32 %v78, 0.0
    %v80 = vmin.f32 %v79, 3.0
    %v81 = vld [vmem:[%s4] sm:$0x7]
    %v82 = vpack.c.bf16 %v80, %v80
    %v83 = vld [vmem:[#allocation5] sm:$0xf]
    %v84 = vld [vmem:[#allocation5 + $0x4] sm:$0xf]
    %v85 = vld [vmem:[#allocation5 + $0x8] sm:$0xf]
    %v86 = vld [vmem:[#allocation5 + $0xc] sm:$0xf]
    %v87 = vlaneseq
    %v88 = vshrl.u32 %v87, 7
    %v89 = vsub.s32 0, %v88
    %v90 = vrot.slane %v81, %v89
    %v95 = vunpack.c.l.b16 %v83
    %v96 = vunpack.c.l.b16 %v84
    %v97 = vunpack.c.l.b16 %v85
    %v98 = vunpack.c.l.b16 %v86
    %v99 = vpack.c.b16 %v96, %v95
    %v100 = vpack.c.b16 %v98, %v97
    %vm103 = vcmask 261120
    %v105 = vsel %vm103, %v82, 0
    %107 = vmatprep.subr.bf16.mxu0 0
    %108 = vmatpush1.bf16.msra.mxu0 %v99
    %109 = vmatprep.subr.bf16.mxu0 0
    %110 = vmatpush1.bf16.msra.mxu0 %v100
    %111 = vmatprep.subr.bf16.mxu0 0
    %112 = vmatpush1.bf16.msra.mxu0 0
    %113 = vmatprep.subr.bf16.mxu0 0
    %114 = vmatpush1.bf16.msra.mxu0 0
    %115 = vmatprep.subr.bf16.mxu0 0
    %116 = vmatpush1.bf16.msra.mxu0 0
    %117 = vmatprep.subr.bf16.mxu0 0
    %118 = vmatpush1.bf16.msra.mxu0 0
    %119 = vmatprep.subr.bf16.mxu0 0
    %120 = vmatpush1.bf16.msra.mxu0 0
    %121 = vmatprep.subr.bf16.mxu0 0
    %122 = vmatpush1.bf16.msra.mxu0 0
    %123 = vmatprep.subr.bf16.mxu0 0
    %124 = vmatpush1.bf16.msra.mxu0 0
    %125 = vmatprep.subr.bf16.mxu0 0
    %126 = vmatpush1.bf16.msra.mxu0 0
    %127 = vmatprep.subr.bf16.mxu0 0
    %128 = vmatpush1.bf16.msra.mxu0 0
    %129 = vmatprep.subr.bf16.mxu0 0
    %130 = vmatpush1.bf16.msra.mxu0 0
    %131 = vmatprep.subr.bf16.mxu0 0
    %132 = vmatpush1.bf16.msra.mxu0 0
    %133 = vmatprep.subr.bf16.mxu0 0
    %134 = vmatpush1.bf16.msra.mxu0 0
    %135 = vmatprep.subr.bf16.mxu0 0
    %136 = vmatpush1.bf16.msra.mxu0 0
    %137 = vmatprep.subr.bf16.mxu0 0
    %138 = vmatpush1.bf16.msra.mxu0 0
    %139 = vmatprep.mubr.bf16.mxu0 0
    %140 = vmatmul.mubr.bf16.gmra.mrb[0].mxu0 %v105
    %v141 = vpop.f32.mrb[0].mxu0
    %v142 = vadd.f32 %v90, %v141
    %v143 = vpop.f32.mrb[0].mxu0
    %v144 = vpop.f32.mrb[0].mxu0
    %v145 = vpop.f32.mrb[0].mxu0
    %146 = vdwg.mxu0
    %v147 = vround.ne.pseudo %v142
    %v148 = vmax.f32 %v147, 0.0
    %v149 = vmin.f32 %v148, 3.0
    %v150 = vpack.c.bf16 %v149, %v149
    %v151 = vld [vmem:[#allocation7] sm:$0xf]
    %v152 = vld [vmem:[#allocation7 + $0x4] sm:$0xf]
    %v153 = vld [vmem:[#allocation7 + $0x8] sm:$0xf]
    %v154 = vld [vmem:[#allocation7 + $0xc] sm:$0xf]
    %v155 = vld [vmem:[#allocation7 + $0x10] sm:$0xf]
    %v156 = vld [vmem:[#allocation7 + $0x14] sm:$0xf]
    %v157 = vld [vmem:[#allocation7 + $0x18] sm:$0xf]
    %v158 = vld [vmem:[#allocation7 + $0x1c] sm:$0xf]
    %v159 = vld [vmem:[#allocation7 + $0x20] sm:$0xf]
    %v160 = vld [vmem:[#allocation7 + $0x24] sm:$0xf]
    %v161 = vld [vmem:[#allocation7 + $0x28] sm:$0xf]
    %v162 = vld [vmem:[#allocation7 + $0x2c] sm:$0xf]
    %v163 = vld [vmem:[#allocation7 + $0x30] sm:$0xf]
    %v164 = vld [vmem:[#allocation7 + $0x34] sm:$0xf]
    %v165 = vld [vmem:[#allocation7 + $0x38] sm:$0xf]
    %v166 = vld [vmem:[#allocation7 + $0x3c] sm:$0xf]
    %v167 = vlaneseq
    %v168 = vshrl.u32 %v167, 7
    %v169 = vsub.s32 1, %v168
    %v170 = vrot.slane %v81, %v169
    %v187 = vunpack.c.l.b16 %v151
    %v188 = vunpack.c.l.b16 %v152
    %v189 = vunpack.c.l.b16 %v153
    %v190 = vunpack.c.l.b16 %v154
    %v191 = vunpack.c.l.b16 %v155
    %v192 = vunpack.c.l.b16 %v156
    %v193 = vunpack.c.l.b16 %v157
    %v194 = vunpack.c.l.b16 %v158
    %v195 = vunpack.c.l.b16 %v159
    %v196 = vunpack.c.l.b16 %v160
    %v197 = vunpack.c.l.b16 %v161
    %v198 = vunpack.c.l.b16 %v162
    %v199 = vunpack.c.l.b16 %v163
    %v200 = vunpack.c.l.b16 %v164
    %v201 = vunpack.c.l.b16 %v165
    %v202 = vunpack.c.l.b16 %v166
    %v203 = vpack.c.b16 %v188, %v187
    %v204 = vpack.c.b16 %v190, %v189
    %v205 = vpack.c.b16 %v192, %v191
    %v206 = vpack.c.b16 %v194, %v193
    %v207 = vpack.c.b16 %v196, %v195
    %v208 = vpack.c.b16 %v198, %v197
    %v209 = vpack.c.b16 %v200, %v199
    %v210 = vpack.c.b16 %v202, %v201
    %219 = vmatprep.subr.bf16.mxu0 0
    %220 = vmatpush1.bf16.msra.mxu0 %v203
    %221 = vmatprep.subr.bf16.mxu0 0
    %222 = vmatpush1.bf16.msra.mxu0 %v204
    %223 = vmatprep.subr.bf16.mxu0 0
    %224 = vmatpush1.bf16.msra.mxu0 %v205
    %225 = vmatprep.subr.bf16.mxu0 0
    %226 = vmatpush1.bf16.msra.mxu0 %v206
    %227 = vmatprep.subr.bf16.mxu0 0
    %228 = vmatpush1.bf16.msra.mxu0 %v207
    %229 = vmatprep.subr.bf16.mxu0 0
    %230 = vmatpush1.bf16.msra.mxu0 %v208
    %231 = vmatprep.subr.bf16.mxu0 0
    %232 = vmatpush1.bf16.msra.mxu0 %v209
    %233 = vmatprep.subr.bf16.mxu0 0
    %234 = vmatpush1.bf16.msra.mxu0 %v210
    %235 = vmatprep.subr.bf16.mxu0 0
    %236 = vmatpush1.bf16.msra.mxu0 0
    %237 = vmatprep.subr.bf16.mxu0 0
    %238 = vmatpush1.bf16.msra.mxu0 0
    %239 = vmatprep.subr.bf16.mxu0 0
    %240 = vmatpush1.bf16.msra.mxu0 0
    %241 = vmatprep.subr.bf16.mxu0 0
    %242 = vmatpush1.bf16.msra.mxu0 0
    %243 = vmatprep.subr.bf16.mxu0 0
    %244 = vmatpush1.bf16.msra.mxu0 0
    %245 = vmatprep.subr.bf16.mxu0 0
    %246 = vmatpush1.bf16.msra.mxu0 0
    %247 = vmatprep.subr.bf16.mxu0 0
    %248 = vmatpush1.bf16.msra.mxu0 0
    %249 = vmatprep.subr.bf16.mxu0 0
    %250 = vmatpush1.bf16.msra.mxu0 0
    %251 = vmatprep.mubr.bf16.mxu0 0
    %252 = vmatmul.mubr.bf16.gmra.mrb[0].mxu0 %v150
    %v253 = vpop.f32.mrb[0].mxu0
    %v254 = vadd.f32 %v170, %v253
    %v255 = vpop.f32.mrb[0].mxu0
    %v256 = vpop.f32.mrb[0].mxu0
    %v257 = vpop.f32.mrb[0].mxu0
    %258 = vdwg.mxu0
    %v259 = vround.ne.pseudo %v254
    %v260 = vmax.f32 %v259, 0.0
    %v261 = vmin.f32 %v260, 3.0
    %v262 = vpack.c.bf16 %v261, %v261
    %v263 = vld [vmem:[#allocation8] sm:$0xf]
    %v264 = vld [vmem:[#allocation8 + $0x4] sm:$0xf]
    %v265 = vld [vmem:[#allocation8 + $0x8] sm:$0xf]
    %v266 = vld [vmem:[#allocation8 + $0xc] sm:$0xf]
    %v267 = vld [vmem:[#allocation8 + $0x10] sm:$0xf]
    %v268 = vld [vmem:[#allocation8 + $0x14] sm:$0xf]
    %v269 = vld [vmem:[#allocation8 + $0x18] sm:$0xf]
    %v270 = vld [vmem:[#allocation8 + $0x1c] sm:$0xf]
    %v271 = vld [vmem:[#allocation8 + $0x20] sm:$0xf]
    %v272 = vld [vmem:[#allocation8 + $0x24] sm:$0xf]
    %v273 = vld [vmem:[#allocation8 + $0x28] sm:$0xf]
    %v274 = vld [vmem:[#allocation8 + $0x2c] sm:$0xf]
    %v275 = vld [vmem:[#allocation8 + $0x30] sm:$0xf]
    %v276 = vld [vmem:[#allocation8 + $0x34] sm:$0xf]
    %v277 = vld [vmem:[#allocation8 + $0x38] sm:$0xf]
    %v278 = vld [vmem:[#allocation8 + $0x3c] sm:$0xf]
    %v279 = vlaneseq
    %v280 = vshrl.u32 %v279, 7
    %v281 = vsub.s32 2, %v280
    %v282 = vrot.slane %v81, %v281
    %v299 = vunpack.c.l.b16 %v263
    %v300 = vunpack.c.l.b16 %v264
    %v301 = vunpack.c.l.b16 %v265
    %v302 = vunpack.c.l.b16 %v266
    %v303 = vunpack.c.l.b16 %v267
    %v304 = vunpack.c.l.b16 %v268
    %v305 = vunpack.c.l.b16 %v269
    %v306 = vunpack.c.l.b16 %v270
    %v307 = vunpack.c.l.b16 %v271
    %v308 = vunpack.c.l.b16 %v272
    %v309 = vunpack.c.l.b16 %v273
    %v310 = vunpack.c.l.b16 %v274
    %v311 = vunpack.c.l.b16 %v275
    %v312 = vunpack.c.l.b16 %v276
    %v313 = vunpack.c.l.b16 %v277
    %v314 = vunpack.c.l.b16 %v278
    %v315 = vpack.c.b16 %v300, %v299
    %v316 = vpack.c.b16 %v302, %v301
    %v317 = vpack.c.b16 %v304, %v303
    %v318 = vpack.c.b16 %v306, %v305
    %v319 = vpack.c.b16 %v308, %v307
    %v320 = vpack.c.b16 %v310, %v309
    %v321 = vpack.c.b16 %v312, %v311
    %v322 = vpack.c.b16 %v314, %v313
    %331 = vmatprep.subr.bf16.mxu0 0
    %332 = vmatpush1.bf16.msra.mxu0 %v315
    %333 = vmatprep.subr.bf16.mxu0 0
    %334 = vmatpush1.bf16.msra.mxu0 %v316
    %335 = vmatprep.subr.bf16.mxu0 0
    %336 = vmatpush1.bf16.msra.mxu0 %v317
    %337 = vmatprep.subr.bf16.mxu0 0
    %338 = vmatpush1.bf16.msra.mxu0 %v318
    %339 = vmatprep.subr.bf16.mxu0 0
    %340 = vmatpush1.bf16.msra.mxu0 %v319
    %341 = vmatprep.subr.bf16.mxu0 0
    %342 = vmatpush1.bf16.msra.mxu0 %v320
    %343 = vmatprep.subr.bf16.mxu0 0
    %344 = vmatpush1.bf16.msra.mxu0 %v321
    %345 = vmatprep.subr.bf16.mxu0 0
    %346 = vmatpush1.bf16.msra.mxu0 %v322
    %347 = vmatprep.subr.bf16.mxu0 0
    %348 = vmatpush1.bf16.msra.mxu0 0
    %349 = vmatprep.subr.bf16.mxu0 0
    %350 = vmatpush1.bf16.msra.mxu0 0
    %351 = vmatprep.subr.bf16.mxu0 0
    %352 = vmatpush1.bf16.msra.mxu0 0
    %353 = vmatprep.subr.bf16.mxu0 0
    %354 = vmatpush1.bf16.msra.mxu0 0
    %355 = vmatprep.subr.bf16.mxu0 0
    %356 = vmatpush1.bf16.msra.mxu0 0
    %357 = vmatprep.subr.bf16.mxu0 0
    %358 = vmatpush1.bf16.msra.mxu0 0
    %359 = vmatprep.subr.bf16.mxu0 0
    %360 = vmatpush1.bf16.msra.mxu0 0
    %361 = vmatprep.subr.bf16.mxu0 0
    %362 = vmatpush1.bf16.msra.mxu0 0
    %363 = vmatprep.mubr.bf16.mxu0 0
    %364 = vmatmul.mubr.bf16.gmra.mrb[0].mxu0 %v262
    %v365 = vpop.f32.mrb[0].mxu0
    %v366 = vadd.f32 %v282, %v365
    %v367 = vpop.f32.mrb[0].mxu0
    %v368 = vpop.f32.mrb[0].mxu0
    %v369 = vpop.f32.mrb[0].mxu0
    %370 = vdwg.mxu0
    %v371 = vround.ne.pseudo %v366
    %v372 = vmax.f32 %v371, -2.0
    %v373 = vmin.f32 %v372, 1.0
    %v374 = vadd.f32 %v373, 0.33
    %vm375 = vcmask 130048
    %376 = vst.msk [vmem:[#allocation10] sm:$0xff] %vm375, %v374
    // Predicated region
    $region38: #{tpu_custom_call.1} parent=1 // pred_check
      _
    $region39: #{tpu_custom_call.1} parent=1 // pred_check_branch
      %378 = sbr.rel (0) target = $region41
    $region40: #{tpu_custom_call.1} parent=1 // pred_region
      %s380 = ssub.s32 128, 128
      %381 = vsyncadd [#allocation4], %s380
      %s383 = sshll.u32 [#allocation10], 4
      %s384 = int_to_ptr.vmem [resolvable:$true] %s383
      %386 = dma.vmem_to_hbm [thread:$0]  %s384, 128, %s5, [#allocation4]
    $region41: #{tpu_custom_call.1} parent=1 // pred_fallthru
      _
    // Predicated region
    $region42: #{tpu_custom_call.1} parent=1 // pred_check
      _
    $region43: #{tpu_custom_call.1} parent=1 // pred_check_branch
      %388 = sbr.rel (0) target = $region45
    $region44: #{tpu_custom_call.1} parent=1 // pred_region
      %389 = dma.done [#allocation4], 128
    $region45: #{tpu_custom_call.1} parent=1 // pred_fallthru
      _
    %390 = vsyncpa [#allocation3], 1
    %391 = vsyncpa [#allocation6], 1
    %392 = vsyncpa [#allocation9], 1
    %393 = vsyncpa [#allocation4], 1

</llo_original>
